<compile_context>
chip_gen: v7x
topology: tpu7x:2x2x1
jax: 0.10.0
libtpu: 0.0.40
codegen_flags: <defaults>
</compile_context>

<pallas_src>
import functools

import jax
import jax.numpy as jnp
from jax.experimental import pallas as pl
from jax.experimental.pallas import tpu as pltpu

INPUT_SIZE = 183
HIDDEN_SIZE = 500
NUM_CLASSES = 1

HID_PAD = 512   # round_up(500, 128)


def _round_up(a, m):
    return (a + m - 1) // m * m


def toynet_kernel(x_ref, w1_ref, b1_ref, w2t_ref, b2_ref, o_ref):
    # fc1 on the MXU: bf16 operands, K = 183 unpadded (Mosaic masks the ragged
    # contraction dim), f32 accumulation.
    xb = x_ref[...].astype(jnp.bfloat16)                               # (bt, 183)
    h = jnp.dot(xb, w1_ref[...], preferred_element_type=jnp.float32)   # (bt, 512)
    # bias + ReLU on the VPU (f32).  Padded hidden cols: bias 0 -> relu -> 0.
    h = jnp.maximum(h + b1_ref[...], 0.0)
    # fc2 has a single output column -> VPU multiply + XLU row reduction
    # instead of an N=1 MXU pass.  Padded hidden cols carry zero weights.
    out = jnp.sum(h * w2t_ref[...], axis=-1, keepdims=True)            # (bt, 1)
    o_ref[...] = (out + b2_ref[...]).astype(o_ref.dtype)


def prepare_params(w1, b1, w2, b2):
    """One-time weight prep (hoisted out of the per-call path).

    w1: (INPUT_SIZE, HIDDEN_SIZE) f32   (transposed vs torch's (out, in))
    b1: (HIDDEN_SIZE,) f32
    w2: (HIDDEN_SIZE, NUM_CLASSES) f32
    b2: (NUM_CLASSES,) f32
    """
    assert w1.shape == (INPUT_SIZE, HIDDEN_SIZE)
    assert b1.shape == (HIDDEN_SIZE,)
    assert w2.shape == (HIDDEN_SIZE, NUM_CLASSES) and NUM_CLASSES == 1
    assert b2.shape == (NUM_CLASSES,)
    w1_p = jnp.pad(w1, ((0, 0), (0, HID_PAD - HIDDEN_SIZE))).astype(jnp.bfloat16)
    b1_p = jnp.pad(b1, (0, HID_PAD - HIDDEN_SIZE)).reshape(1, HID_PAD).astype(jnp.float32)
    w2t_p = jnp.pad(w2[:, 0], (0, HID_PAD - HIDDEN_SIZE)).reshape(1, HID_PAD).astype(jnp.float32)
    b2_p = b2.reshape(1, NUM_CLASSES).astype(jnp.float32)
    return w1_p, b1_p, w2t_p, b2_p


@functools.partial(jax.jit, static_argnames=("block_batch",))
def toynet_forward(x, params, *, block_batch=1024):
    """ToyNet forward.

    x:      (B, INPUT_SIZE) f32 or bf16
    params: output of prepare_params()
    returns (B, NUM_CLASSES) f32
    """
    w1_p, b1_p, w2t_p, b2_p = params
    B, in_f = x.shape
    assert in_f == INPUT_SIZE

    # Pad B only to a multiple of 8 sublanes (and only if needed).
    b_pad = _round_up(max(B, 8), 8)
    x_in = x if b_pad == B else jnp.pad(x, ((0, b_pad - B), (0, 0)))

    # Batch tile: multiple of 8, capped so the grid has >= 2 tiles whenever
    # possible (keeps both v7x TensorCores busy; no-op on v5e/v6e).
    bt = max(8, min(_round_up(block_batch, 8), _round_up(pl.cdiv(b_pad, 2), 8)))
    grid = (pl.cdiv(b_pad, bt),)   # last tile may be partial; masked by Pallas

    out = pl.pallas_call(
        toynet_kernel,
        out_shape=jax.ShapeDtypeStruct((b_pad, NUM_CLASSES), jnp.float32),
        grid=grid,
        in_specs=[
            pl.BlockSpec((bt, INPUT_SIZE), lambda i: (i, 0)),     # x tile streams, K unpadded
            pl.BlockSpec((INPUT_SIZE, HID_PAD), lambda i: (0, 0)),  # w1 resident (bf16)
            pl.BlockSpec((1, HID_PAD), lambda i: (0, 0)),         # b1 resident
            pl.BlockSpec((1, HID_PAD), lambda i: (0, 0)),         # w2^T resident
            pl.BlockSpec((1, NUM_CLASSES), lambda i: (0, 0)),     # b2 resident
        ],
        out_specs=pl.BlockSpec((bt, NUM_CLASSES), lambda i: (i, 0)),
        compiler_params=pltpu.CompilerParams(
            dimension_semantics=("parallel",),   # shard batch tiles across v7x's 2 TCs
        ),
    )(x_in, w1_p, b1_p, w2t_p, b2_p)
    return out[:B]


def init_params(key):
    """Deterministic init matching PyTorch nn.Linear default (stored transposed)."""
    k1, k2, k3, k4 = jax.random.split(key, 4)
    bound1 = 1.0 / jnp.sqrt(INPUT_SIZE)
    bound2 = 1.0 / jnp.sqrt(HIDDEN_SIZE)
    w1 = jax.random.uniform(k1, (INPUT_SIZE, HIDDEN_SIZE), jnp.float32, -bound1, bound1)
    b1 = jax.random.uniform(k2, (HIDDEN_SIZE,), jnp.float32, -bound1, bound1)
    w2 = jax.random.uniform(k3, (HIDDEN_SIZE, NUM_CLASSES), jnp.float32, -bound2, bound2)
    b2 = jax.random.uniform(k4, (NUM_CLASSES,), jnp.float32, -bound2, bound2)
    return w1, b1, w2, b2


def _ref_f32(x, w1, b1, w2, b2):
    h = jnp.maximum(x.astype(jnp.float32) @ w1 + b1[None, :], 0.0)
    return h @ w2 + b2[None, :]


def _ref_bf16_matched(x, w1, b1, w2, b2):
    # Same numerics as the kernel: bf16 fc1 matmul inputs, f32 accumulation.
    h = jnp.dot(x.astype(jnp.bfloat16), w1.astype(jnp.bfloat16),
                preferred_element_type=jnp.float32)
    h = jnp.maximum(h + b1[None, :], 0.0)
    return h @ w2 + b2[None, :]


if __name__ == "__main__":
    key = jax.random.PRNGKey(0)
    kx, kx2, kp = jax.random.split(key, 3)
    w1, b1, w2, b2 = init_params(kp)
    params = prepare_params(w1, b1, w2, b2)

    # Small single-tile run (B multiple of 8, grid of 1 step).
    batch = 8
    x = jax.random.normal(kx, (batch, INPUT_SIZE), dtype=jnp.float32)
    out = jax.block_until_ready(toynet_forward(x, params))
    assert out.shape == (batch, NUM_CLASSES)
    assert jnp.allclose(out, _ref_bf16_matched(x, w1, b1, w2, b2), atol=2e-3, rtol=2e-3)
    assert jnp.allclose(out, _ref_f32(x, w1, b1, w2, b2), atol=5e-2, rtol=5e-2)

    # Multi-tile run exercising the ragged paths: B=36 -> b_pad=40 (B%8 != 0),
    # bt=16 -> grid of 3 steps with a partial final tile (40 vs 48).
    batch2 = 36
    x2 = jax.random.normal(kx2, (batch2, INPUT_SIZE), dtype=jnp.float32)
    out2 = jax.block_until_ready(toynet_forward(x2, params, block_batch=16))
    assert out2.shape == (batch2, NUM_CLASSES)
    assert jnp.allclose(out2, _ref_bf16_matched(x2, w1, b1, w2, b2), atol=2e-3, rtol=2e-3)
    assert jnp.allclose(out2, _ref_f32(x2, w1, b1, w2, b2), atol=5e-2, rtol=5e-2)

    print("KERNEL_OK")
</pallas_src>

<mosaic_0001>
module attributes {stable_mosaic.version = 11 : i64} {
  func.func @toynet_kernel(%arg0: i32, %arg1: memref<8x183xf32, #tpu.memory_space<vmem>>, %arg2: memref<183x512xbf16, #tpu.memory_space<vmem>>, %arg3: memref<1x512xf32, #tpu.memory_space<vmem>>, %arg4: memref<1x512xf32, #tpu.memory_space<vmem>>, %arg5: memref<1x1xf32, #tpu.memory_space<vmem>>, %arg6: memref<8x1xf32, #tpu.memory_space<vmem>>) attributes {dimension_semantics = [#tpu.dimension_semantics<parallel>], iteration_bounds = array<i64: 1>, scalar_prefetch = 0 : i64, scratch_operands = 0 : i64, tpu.core_type = #tpu.core_type<tc>, window_params = [{transform_indices = @transform_0, window_bounds = array<i64: 8, 183>}, {pipeline_mode = #tpu.pipeline_mode<synchronous>, transform_indices = @transform_1, window_bounds = array<i64: 183, 512>}, {pipeline_mode = #tpu.pipeline_mode<synchronous>, transform_indices = @transform_2, window_bounds = array<i64: 1, 512>}, {pipeline_mode = #tpu.pipeline_mode<synchronous>, transform_indices = @transform_3, window_bounds = array<i64: 1, 512>}, {pipeline_mode = #tpu.pipeline_mode<synchronous>, transform_indices = @transform_4, window_bounds = array<i64: 1, 1>}, {transform_indices = @transform_5, window_bounds = array<i64: 8, 1>}]} {
    %c0 = arith.constant 0 : index
    %c0_0 = arith.constant 0 : index
    %0 = vector.load %arg1[%c0, %c0_0] : memref<8x183xf32, #tpu.memory_space<vmem>>, vector<8x183xf32>
    %1 = arith.truncf %0 : vector<8x183xf32> to vector<8x183xbf16>
    %c0_1 = arith.constant 0 : index
    %c0_2 = arith.constant 0 : index
    %2 = vector.load %arg2[%c0_1, %c0_2] : memref<183x512xbf16, #tpu.memory_space<vmem>>, vector<183x512xbf16>
    %cst = arith.constant dense<0.000000e+00> : vector<8x512xf32>
    %3 = tpu.matmul %1, %2, %cst {dimension_numbers = #tpu.dot_dimension_numbers<[1], [0], [0], [1], [0, 0, 1, 1], [], []>} : vector<8x183xbf16>, vector<183x512xbf16>, vector<8x512xf32> -> vector<8x512xf32>
    %c0_3 = arith.constant 0 : index
    %c0_4 = arith.constant 0 : index
    %4 = vector.load %arg3[%c0_3, %c0_4] : memref<1x512xf32, #tpu.memory_space<vmem>>, vector<1x512xf32>
    %5 = vector.broadcast %4 : vector<1x512xf32> to vector<8x512xf32>
    %6 = arith.addf %3, %5 : vector<8x512xf32>
    %cst_5 = arith.constant 0.000000e+00 : f32
    %7 = vector.broadcast %cst_5 : f32 to vector<8x512xf32>
    %8 = arith.maximumf %6, %7 : vector<8x512xf32>
    %c0_6 = arith.constant 0 : index
    %c0_7 = arith.constant 0 : index
    %9 = vector.load %arg4[%c0_6, %c0_7] : memref<1x512xf32, #tpu.memory_space<vmem>>, vector<1x512xf32>
    %10 = vector.broadcast %9 : vector<1x512xf32> to vector<8x512xf32>
    %11 = arith.mulf %8, %10 : vector<8x512xf32>
    %cst_8 = arith.constant dense<0.000000e+00> : vector<8xf32>
    %12 = vector.multi_reduction <add>, %11, %cst_8 [1] : vector<8x512xf32> to vector<8xf32>
    %13 = vector.shape_cast %12 : vector<8xf32> to vector<8x1xf32>
    %c0_9 = arith.constant 0 : index
    %c0_10 = arith.constant 0 : index
    %14 = vector.load %arg5[%c0_9, %c0_10] : memref<1x1xf32, #tpu.memory_space<vmem>>, vector<1x1xf32>
    %15 = vector.broadcast %14 : vector<1x1xf32> to vector<8x1xf32>
    %16 = arith.addf %13, %15 : vector<8x1xf32>
    %c0_11 = arith.constant 0 : index
    %c0_12 = arith.constant 0 : index
    %17 = vector.load %arg6[%c0_11, %c0_12] : memref<8x1xf32, #tpu.memory_space<vmem>>, vector<8x1xf32>
    tpu.vector_store %arg6[%c0_11, %c0_12], %16 {strides = array<i32>} : memref<8x1xf32, #tpu.memory_space<vmem>>, vector<8x1xf32>,
    return
  }
  func.func @transform_0(%arg0: i32) -> (i32, i32) {
    %c0_i32 = arith.constant 0 : i32
    %c0_i32_0 = arith.constant 0 : i32
    return %arg0, %c0_i32 : i32, i32
  }
  func.func @transform_1(%arg0: i32) -> (i32, i32) {
    %c0_i32 = arith.constant 0 : i32
    %c0_i32_0 = arith.constant 0 : i32
    %c0_i32_1 = arith.constant 0 : i32
    return %c0_i32, %c0_i32_0 : i32, i32
  }
  func.func @transform_2(%arg0: i32) -> (i32, i32) {
    %c0_i32 = arith.constant 0 : i32
    %c0_i32_0 = arith.constant 0 : i32
    %c0_i32_1 = arith.constant 0 : i32
    return %c0_i32, %c0_i32_0 : i32, i32
  }
  func.func @transform_3(%arg0: i32) -> (i32, i32) {
    %c0_i32 = arith.constant 0 : i32
    %c0_i32_0 = arith.constant 0 : i32
    %c0_i32_1 = arith.constant 0 : i32
    return %c0_i32, %c0_i32_0 : i32, i32
  }
  func.func @transform_4(%arg0: i32) -> (i32, i32) {
    %c0_i32 = arith.constant 0 : i32
    %c0_i32_0 = arith.constant 0 : i32
    %c0_i32_1 = arith.constant 0 : i32
    return %c0_i32, %c0_i32_0 : i32, i32
  }
  func.func @transform_5(%arg0: i32) -> (i32, i32) {
    %c0_i32 = arith.constant 0 : i32
    %c0_i32_0 = arith.constant 0 : i32
    return %arg0, %c0_i32 : i32, i32
  }
}

</mosaic_0001>

<llo_original>
// kernel: toynet_forward.1
$region0: #{toynet_forward.1}
  #allocation0 [shape = 'u32[]', space=smem, size = 0x4, offset = 0x4, fixed_abs, tag = 'smem constant byte address 0x4 - core index']
  #allocation1 [shape = 'u32[144,128]{1,0:T(1,128)}', space=vmem, size = 0x12000, scoped, tag = 'internal scratch']
  #allocation2 [shape = 'f32[1,1]{1,0:T(1,128)S(1)}', space=vmem, size = 0x200, scoped, tag = 'scoped memory for toynet_forward.1']
  %s0 = inlined_call_operand.hbm [shape: f32[8,183], index: 0, kind: input, shape index: {}]
  %s1 = inlined_call_operand.hbm [shape: bf16[183,512], index: 1, kind: input, shape index: {}]
  %s2 = inlined_call_operand.vmem [shape: f32[1,512], index: 2, kind: input, shape index: {}]
  %s3 = inlined_call_operand.vmem [shape: f32[1,512], index: 3, kind: input, shape index: {}]
  %s4 = inlined_call_operand.<no memory space> [shape: f32[1,1], index: 4, kind: input, shape index: {}]
  %s5 = inlined_call_operand.vmem [shape: f32[8,1], index: 5, kind: output, shape index: {}]
  %s6 = sld [smem:[#allocation0]]
  $region38: #{toynet_forward.1} parent=0
    _
  %s8 = ssub.s32 1, %s6
  %s9 = scalar_select 0, %s8, %s6
  %v10 = vstv %s4
  %11 = vst [vmem:[#allocation2] sm:$0x1] %v10
  $region1: #{toynet_forward.1} parent=0
    #allocation3 [shape = 'u8[8192]{0}', space=vmem, size = 0x2000, scoped, tag = 'input window, operand 0, single buffered']
    #allocation4 [shape = 's32[1]{0}', space=sflag, size = 0x4, scoped, tag = 'scoped memory for toynet_forward.1']
    #allocation5 [shape = 'u8[188416]{0}', space=vmem, size = 0x2e000, scoped, tag = 'input window, operand 1, single buffered']
    #allocation6 [shape = 's32[1]{0}', space=sflag, size = 0x4, scoped, tag = 'scoped memory for toynet_forward.1']
    %12 = vsyncpa [#allocation4], 0
    %13 = vsyncpa [#allocation6], 0
    // Predicated region
    $region2: #{toynet_forward.1} parent=1 // pred_check
      _
    $region3: #{toynet_forward.1} parent=1 // pred_check_branch
      %15 = sbr.rel (0) target = $region5
    $region4: #{toynet_forward.1} parent=1 // pred_region
      %s17 = ssub.s32 256, 256
      %18 = vsyncadd [#allocation4], %s17
      %s20 = sshll.u32 [#allocation3], 4
      %s21 = int_to_ptr.vmem [resolvable:$true] %s20
      %23 = dma.hbm_to_vmem [thread:$0]  %s0, 256, %s21, [#allocation4]
    $region5: #{toynet_forward.1} parent=1 // pred_fallthru
      _
    // Predicated region
    $region6: #{toynet_forward.1} parent=1 // pred_check
      _
    $region7: #{toynet_forward.1} parent=1 // pred_check_branch
      %25 = sbr.rel (0) target = $region9
    $region8: #{toynet_forward.1} parent=1 // pred_region
      %s27 = ssub.s32 5888, 5888
      %28 = vsyncadd [#allocation6], %s27
      %s29 = sshll.u32 [#allocation5], 4
      %s30 = int_to_ptr.vmem [resolvable:$true] %s29
      %35 = dma.hbm_to_vmem [thread:$0]  %s1, 5888, %s30, [#allocation6], 256, 256, 16
    $region9: #{toynet_forward.1} parent=1 // pred_fallthru
      _
    // Predicated region
    $region10: #{toynet_forward.1} parent=1 // pred_check
      _
    $region11: #{toynet_forward.1} parent=1 // pred_check_branch
      %37 = sbr.rel (0) target = $region13
    $region12: #{toynet_forward.1} parent=1 // pred_region
      _
    $region13: #{toynet_forward.1} parent=1 // pred_fallthru
      _
    // Predicated region
    $region14: #{toynet_forward.1} parent=1 // pred_check
      _
    $region15: #{toynet_forward.1} parent=1 // pred_check_branch
      %39 = sbr.rel (0) target = $region17
    $region16: #{toynet_forward.1} parent=1 // pred_region
      _
    $region17: #{toynet_forward.1} parent=1 // pred_fallthru
      _
    // Predicated region
    $region18: #{toynet_forward.1} parent=1 // pred_check
      _
    $region19: #{toynet_forward.1} parent=1 // pred_check_branch
      %41 = sbr.rel (0) target = $region21
    $region20: #{toynet_forward.1} parent=1 // pred_region
      _
    $region21: #{toynet_forward.1} parent=1 // pred_fallthru
      _
    // Predicated region
    $region22: #{toynet_forward.1} parent=1 // pred_check
      _
    $region23: #{toynet_forward.1} parent=1 // pred_check_branch
      %43 = sbr.rel (0) target = $region25
    $region24: #{toynet_forward.1} parent=1 // pred_region
      %44 = dma.done [#allocation4], 256
    $region25: #{toynet_forward.1} parent=1 // pred_fallthru
      _
    // Predicated region
    $region26: #{toynet_forward.1} parent=1 // pred_check
      _
    $region27: #{toynet_forward.1} parent=1 // pred_check_branch
      %46 = sbr.rel (0) target = $region29
    $region28: #{toynet_forward.1} parent=1 // pred_region
      %47 = dma.done [#allocation6], 5888
    $region29: #{toynet_forward.1} parent=1 // pred_fallthru
      _
    %v49 = vld [vmem:[#allocation3] sm:$0xff]
    %v50 = vld [vmem:[#allocation3 + $0x8] sm:$0xff]
    %v51 = vpack.c.bf16 %v49, %v49
    %v52 = vpack.c.bf16 %v50, %v50
    %v53 = vld [vmem:[#allocation5] sm:$0xff]
    %v54 = vld [vmem:[#allocation5 + $0x8] sm:$0xff]
    %v55 = vld [vmem:[#allocation5 + $0x10] sm:$0xff]
    %v56 = vld [vmem:[#allocation5 + $0x18] sm:$0xff]
    %v57 = vld [vmem:[#allocation5 + $0x20] sm:$0xff]
    %v58 = vld [vmem:[#allocation5 + $0x28] sm:$0xff]
    %v59 = vld [vmem:[#allocation5 + $0x30] sm:$0xff]
    %v60 = vld [vmem:[#allocation5 + $0x38] sm:$0xff]
    %v61 = vld [vmem:[#allocation5 + $0x40] sm:$0xff]
    %v62 = vld [vmem:[#allocation5 + $0x48] sm:$0xff]
    %v63 = vld [vmem:[#allocation5 + $0x50] sm:$0xff]
    %v64 = vld [vmem:[#allocation5 + $0x58] sm:$0xff]
    %v65 = vld [vmem:[#allocation5 + $0x60] sm:$0xff]
    %v66 = vld [vmem:[#allocation5 + $0x68] sm:$0xff]
    %v67 = vld [vmem:[#allocation5 + $0x70] sm:$0xff]
    %v68 = vld [vmem:[#allocation5 + $0x78] sm:$0xff]
    %v69 = vld [vmem:[#allocation5 + $0x80] sm:$0xff]
    %v70 = vld [vmem:[#allocation5 + $0x88] sm:$0xff]
    %v71 = vld [vmem:[#allocation5 + $0x90] sm:$0xff]
    %v72 = vld [vmem:[#allocation5 + $0x98] sm:$0xff]
    %v73 = vld [vmem:[#allocation5 + $0xa0] sm:$0xff]
    %v74 = vld [vmem:[#allocation5 + $0xa8] sm:$0xff]
    %v75 = vld [vmem:[#allocation5 + $0xb0] sm:$0xff]
    %v76 = vld [vmem:[#allocation5 + $0xb8] sm:$0xff]
    %v77 = vld [vmem:[#allocation5 + $0xc0] sm:$0xff]
    %v78 = vld [vmem:[#allocation5 + $0xc8] sm:$0xff]
    %v79 = vld [vmem:[#allocation5 + $0xd0] sm:$0xff]
    %v80 = vld [vmem:[#allocation5 + $0xd8] sm:$0xff]
    %v81 = vld [vmem:[#allocation5 + $0xe0] sm:$0xff]
    %v82 = vld [vmem:[#allocation5 + $0xe8] sm:$0xff]
    %v83 = vld [vmem:[#allocation5 + $0xf0] sm:$0xff]
    %v84 = vld [vmem:[#allocation5 + $0xf8] sm:$0xff]
    %v85 = vld [vmem:[#allocation5 + $0x100] sm:$0xff]
    %v86 = vld [vmem:[#allocation5 + $0x108] sm:$0xff]
    %v87 = vld [vmem:[#allocation5 + $0x110] sm:$0xff]
    %v88 = vld [vmem:[#allocation5 + $0x118] sm:$0xff]
    %v89 = vld [vmem:[#allocation5 + $0x120] sm:$0xff]
    %v90 = vld [vmem:[#allocation5 + $0x128] sm:$0xff]
    %v91 = vld [vmem:[#allocation5 + $0x130] sm:$0xff]
    %v92 = vld [vmem:[#allocation5 + $0x138] sm:$0xff]
    %v93 = vld [vmem:[#allocation5 + $0x140] sm:$0xff]
    %v94 = vld [vmem:[#allocation5 + $0x148] sm:$0xff]
    %v95 = vld [vmem:[#allocation5 + $0x150] sm:$0xff]
    %v96 = vld [vmem:[#allocation5 + $0x158] sm:$0xff]
    %v97 = vld [vmem:[#allocation5 + $0x160] sm:$0xff]
    %v98 = vld [vmem:[#allocation5 + $0x168] sm:$0xff]
    %v99 = vld [vmem:[%s2] sm:$0xf]
    %v101 = vlaneseq
    %v102 = vshrl.u32 %v101, 7
    %v103 = vsub.s32 0, %v102
    %v104 = vrot.slane %v99, %v103
    %v105 = vlaneseq
    %v106 = vshrl.u32 %v105, 7
    %v107 = vsub.s32 1, %v106
    %v108 = vrot.slane %v99, %v107
    %v109 = vlaneseq
    %v110 = vshrl.u32 %v109, 7
    %v111 = vsub.s32 2, %v110
    %v112 = vrot.slane %v99, %v111
    %v113 = vlaneseq
    %v114 = vshrl.u32 %v113, 7
    %v115 = vsub.s32 3, %v114
    %v116 = vrot.slane %v99, %v115
    %v167 = vunpack.c.l.b16 %v53
    %v168 = vunpack.c.h.b16 %v53
    %v169 = vunpack.c.l.b16 %v54
    %v170 = vunpack.c.h.b16 %v54
    %v171 = vunpack.c.l.b16 %v55
    %v172 = vunpack.c.h.b16 %v55
    %v173 = vunpack.c.l.b16 %v56
    %v174 = vunpack.c.h.b16 %v56
    %v175 = vunpack.c.l.b16 %v57
    %v176 = vunpack.c.h.b16 %v57
    %v177 = vunpack.c.l.b16 %v58
    %v178 = vunpack.c.h.b16 %v58
    %v179 = vunpack.c.l.b16 %v59
    %v180 = vunpack.c.h.b16 %v59
    %v181 = vunpack.c.l.b16 %v60
    %v182 = vunpack.c.h.b16 %v60
    %v183 = vunpack.c.l.b16 %v61
    %v184 = vunpack.c.h.b16 %v61
    %v185 = vunpack.c.l.b16 %v62
    %v186 = vunpack.c.h.b16 %v62
    %v187 = vunpack.c.l.b16 %v63
    %v188 = vunpack.c.h.b16 %v63
    %v189 = vunpack.c.l.b16 %v64
    %v190 = vunpack.c.h.b16 %v64
    %v191 = vunpack.c.l.b16 %v65
    %v192 = vunpack.c.h.b16 %v65
    %v193 = vunpack.c.l.b16 %v66
    %v194 = vunpack.c.h.b16 %v66
    %v195 = vunpack.c.l.b16 %v67
    %v196 = vunpack.c.h.b16 %v67
    %v197 = vunpack.c.l.b16 %v68
    %v198 = vunpack.c.h.b16 %v68
    %v199 = vunpack.c.l.b16 %v69
    %v200 = vunpack.c.h.b16 %v69
    %v201 = vunpack.c.l.b16 %v70
    %v202 = vunpack.c.h.b16 %v70
    %v203 = vunpack.c.l.b16 %v71
    %v204 = vunpack.c.h.b16 %v71
    %v205 = vunpack.c.l.b16 %v72
    %v206 = vunpack.c.h.b16 %v72
    %v207 = vunpack.c.l.b16 %v73
    %v208 = vunpack.c.h.b16 %v73
    %v209 = vunpack.c.l.b16 %v74
    %v210 = vunpack.c.h.b16 %v74
    %v211 = vunpack.c.l.b16 %v75
    %v212 = vunpack.c.h.b16 %v75
    %v213 = vunpack.c.l.b16 %v76
    %v214 = vunpack.c.h.b16 %v76
    %v215 = vunpack.c.l.b16 %v77
    %v216 = vunpack.c.h.b16 %v77
    %v217 = vunpack.c.l.b16 %v78
    %v218 = vunpack.c.h.b16 %v78
    %v219 = vunpack.c.l.b16 %v79
    %v220 = vunpack.c.h.b16 %v79
    %v221 = vunpack.c.l.b16 %v80
    %v222 = vunpack.c.h.b16 %v80
    %v223 = vunpack.c.l.b16 %v81
    %v224 = vunpack.c.h.b16 %v81
    %v225 = vunpack.c.l.b16 %v82
    %v226 = vunpack.c.h.b16 %v82
    %v227 = vunpack.c.l.b16 %v83
    %v228 = vunpack.c.h.b16 %v83
    %v229 = vunpack.c.l.b16 %v84
    %v230 = vunpack.c.h.b16 %v84
    %v231 = vunpack.c.l.b16 %v85
    %v232 = vunpack.c.h.b16 %v85
    %v233 = vunpack.c.l.b16 %v86
    %v234 = vunpack.c.h.b16 %v86
    %v235 = vunpack.c.l.b16 %v87
    %v236 = vunpack.c.h.b16 %v87
    %v237 = vunpack.c.l.b16 %v88
    %v238 = vunpack.c.h.b16 %v88
    %v239 = vunpack.c.l.b16 %v89
    %v240 = vunpack.c.h.b16 %v89
    %v241 = vunpack.c.l.b16 %v90
    %v242 = vunpack.c.h.b16 %v90
    %v243 = vunpack.c.l.b16 %v91
    %v244 = vunpack.c.h.b16 %v91
    %v245 = vunpack.c.l.b16 %v92
    %v246 = vunpack.c.h.b16 %v92
    %v247 = vunpack.c.l.b16 %v93
    %v248 = vunpack.c.h.b16 %v93
    %v249 = vunpack.c.l.b16 %v94
    %v250 = vunpack.c.h.b16 %v94
    %v251 = vunpack.c.l.b16 %v95
    %v252 = vunpack.c.h.b16 %v95
    %v253 = vunpack.c.l.b16 %v96
    %v254 = vunpack.c.h.b16 %v96
    %v255 = vunpack.c.l.b16 %v97
    %v256 = vunpack.c.h.b16 %v97
    %v257 = vunpack.c.l.b16 %v98
    %v258 = vunpack.c.h.b16 %v98
    %v259 = vpack.c.b16 %v171, %v167
    %v260 = vpack.c.b16 %v172, %v168
    %v261 = vpack.c.b16 %v173, %v169
    %v262 = vpack.c.b16 %v174, %v170
    %v263 = vpack.c.b16 %v179, %v175
    %v264 = vpack.c.b16 %v180, %v176
    %v265 = vpack.c.b16 %v181, %v177
    %v266 = vpack.c.b16 %v182, %v178
    %v267 = vpack.c.b16 %v187, %v183
    %v268 = vpack.c.b16 %v188, %v184
    %v269 = vpack.c.b16 %v189, %v185
    %v270 = vpack.c.b16 %v190, %v186
    %v271 = vpack.c.b16 %v195, %v191
    %v272 = vpack.c.b16 %v196, %v192
    %v273 = vpack.c.b16 %v197, %v193
    %v274 = vpack.c.b16 %v198, %v194
    %v275 = vpack.c.b16 %v203, %v199
    %v276 = vpack.c.b16 %v204, %v200
    %v277 = vpack.c.b16 %v205, %v201
    %v278 = vpack.c.b16 %v206, %v202
    %v279 = vpack.c.b16 %v211, %v207
    %v280 = vpack.c.b16 %v212, %v208
    %v281 = vpack.c.b16 %v213, %v209
    %v282 = vpack.c.b16 %v214, %v210
    %v283 = vpack.c.b16 %v219, %v215
    %v284 = vpack.c.b16 %v220, %v216
    %v285 = vpack.c.b16 %v221, %v217
    %v286 = vpack.c.b16 %v222, %v218
    %v287 = vpack.c.b16 %v227, %v223
    %v288 = vpack.c.b16 %v228, %v224
    %v289 = vpack.c.b16 %v229, %v225
    %v290 = vpack.c.b16 %v230, %v226
    %v291 = vpack.c.b16 %v235, %v231
    %v292 = vpack.c.b16 %v236, %v232
    %v293 = vpack.c.b16 %v237, %v233
    %v294 = vpack.c.b16 %v238, %v234
    %v295 = vpack.c.b16 %v243, %v239
    %v296 = vpack.c.b16 %v244, %v240
    %v297 = vpack.c.b16 %v245, %v241
    %v298 = vpack.c.b16 %v246, %v242
    %v299 = vpack.c.b16 %v251, %v247
    %v300 = vpack.c.b16 %v252, %v248
    %v301 = vpack.c.b16 %v253, %v249
    %v302 = vpack.c.b16 %v254, %v250
    %v303 = vpack.c.b16 %v255, %v255
    %v304 = vpack.c.b16 %v256, %v256
    %v305 = vpack.c.b16 %v257, %v257
    %v306 = vpack.c.b16 %v258, %v258
    %vm351 = vcmask 449536
    %v353 = vsel %vm351, %v52, 0
    %vm355 = vcmask 1042432
    %vm356 = vcmask 1043456
    %v357 = vsel %vm355, 4294967295, 65535
    %v358 = vsel %vm356, %v357, 0
    %v360 = vand.u32 %v303, %v358
    %v363 = vand.u32 %v304, %v358
    %v366 = vand.u32 %v305, %v358
    %v369 = vand.u32 %v306, %v358
    %371 = vmatprep.subr.bf16.mxu0 %v260
    %372 = vmatpush1.bf16.msra.mxu0 %v259
    %373 = vmatprep.subr.bf16.mxu0 %v264
    %374 = vmatpush1.bf16.msra.mxu0 %v263
    %375 = vmatprep.subr.bf16.mxu0 %v268
    %376 = vmatpush1.bf16.msra.mxu0 %v267
    %377 = vmatprep.subr.bf16.mxu0 %v272
    %378 = vmatpush1.bf16.msra.mxu0 %v271
    %379 = vmatprep.subr.bf16.mxu0 %v276
    %380 = vmatpush1.bf16.msra.mxu0 %v275
    %381 = vmatprep.subr.bf16.mxu0 %v280
    %382 = vmatpush1.bf16.msra.mxu0 %v279
    %383 = vmatprep.subr.bf16.mxu0 %v284
    %384 = vmatpush1.bf16.msra.mxu0 %v283
    %385 = vmatprep.subr.bf16.mxu0 %v288
    %386 = vmatpush1.bf16.msra.mxu0 %v287
    %387 = vmatprep.subr.bf16.mxu0 %v292
    %388 = vmatpush1.bf16.msra.mxu0 %v291
    %389 = vmatprep.subr.bf16.mxu0 %v296
    %390 = vmatpush1.bf16.msra.mxu0 %v295
    %391 = vmatprep.subr.bf16.mxu0 %v300
    %392 = vmatpush1.bf16.msra.mxu0 %v299
    %393 = vmatprep.subr.bf16.mxu0 %v363
    %394 = vmatpush1.bf16.msra.mxu0 %v360
    %395 = vmatprep.subr.bf16.mxu0 0
    %396 = vmatpush1.bf16.msra.mxu0 0
    %397 = vmatprep.subr.bf16.mxu0 0
    %398 = vmatpush1.bf16.msra.mxu0 0
    %399 = vmatprep.subr.bf16.mxu0 0
    %400 = vmatpush1.bf16.msra.mxu0 0
    %401 = vmatprep.subr.bf16.mxu0 0
    %402 = vmatpush1.bf16.msra.mxu0 0
    %403 = vmatprep.mubr.bf16.mxu0 %v353
    %404 = vmatmul.mubr.bf16.gmra.mrb[0].mxu0 %v51
    %v405 = vpop.f32.mrb[0].mxu0
    %v406 = vadd.f32 %v104, %v405
    %v407 = vpop.f32.mrb[0].mxu0
    %v408 = vadd.f32 %v108, %v407
    %v409 = vpop.f32.mrb[0].mxu0
    %v410 = vpop.f32.mrb[0].mxu0
    %411 = vdwg.mxu0
    %412 = vmatprep.subr.bf16.mxu0 %v262
    %413 = vmatpush1.bf16.msra.mxu0 %v261
    %414 = vmatprep.subr.bf16.mxu0 %v266
    %415 = vmatpush1.bf16.msra.mxu0 %v265
    %416 = vmatprep.subr.bf16.mxu0 %v270
    %417 = vmatpush1.bf16.msra.mxu0 %v269
    %418 = vmatprep.subr.bf16.mxu0 %v274
    %419 = vmatpush1.bf16.msra.mxu0 %v273
    %420 = vmatprep.subr.bf16.mxu0 %v278
    %421 = vmatpush1.bf16.msra.mxu0 %v277
    %422 = vmatprep.subr.bf16.mxu0 %v282
    %423 = vmatpush1.bf16.msra.mxu0 %v281
    %424 = vmatprep.subr.bf16.mxu0 %v286
    %425 = vmatpush1.bf16.msra.mxu0 %v285
    %426 = vmatprep.subr.bf16.mxu0 %v290
    %427 = vmatpush1.bf16.msra.mxu0 %v289
    %428 = vmatprep.subr.bf16.mxu0 %v294
    %429 = vmatpush1.bf16.msra.mxu0 %v293
    %430 = vmatprep.subr.bf16.mxu0 %v298
    %431 = vmatpush1.bf16.msra.mxu0 %v297
    %432 = vmatprep.subr.bf16.mxu0 %v302
    %433 = vmatpush1.bf16.msra.mxu0 %v301
    %434 = vmatprep.subr.bf16.mxu0 %v369
    %435 = vmatpush1.bf16.msra.mxu0 %v366
    %436 = vmatprep.subr.bf16.mxu0 0
    %437 = vmatpush1.bf16.msra.mxu0 0
    %438 = vmatprep.subr.bf16.mxu0 0
    %439 = vmatpush1.bf16.msra.mxu0 0
    %440 = vmatprep.subr.bf16.mxu0 0
    %441 = vmatpush1.bf16.msra.mxu0 0
    %442 = vmatprep.subr.bf16.mxu0 0
    %443 = vmatpush1.bf16.msra.mxu0 0
    %444 = vmatprep.mubr.bf16.mxu0 %v353
    %445 = vmatmul.mubr.bf16.gmra.mrb[0].mxu0 %v51
    %v446 = vpop.f32.mrb[0].mxu0
    %v447 = vadd.f32 %v112, %v446
    %v448 = vpop.f32.mrb[0].mxu0
    %v449 = vadd.f32 %v116, %v448
    %v450 = vpop.f32.mrb[0].mxu0
    %v451 = vpop.f32.mrb[0].mxu0
    %452 = vdwg.mxu0
    %v453 = vmax.f32 %v406, 0.0
    %v454 = vmax.f32 %v408, 0.0
    %v455 = vmax.f32 %v447, 0.0
    %v456 = vmax.f32 %v449, 0.0
    %v457 = vld [vmem:[%s3] sm:$0xf]
    %v459 = vlaneseq
    %v460 = vshrl.u32 %v459, 7
    %v461 = vsub.s32 0, %v460
    %v462 = vrot.slane %v457, %v461
    %v463 = vlaneseq
    %v464 = vshrl.u32 %v463, 7
    %v465 = vsub.s32 1, %v464
    %v466 = vrot.slane %v457, %v465
    %v467 = vlaneseq
    %v468 = vshrl.u32 %v467, 7
    %v469 = vsub.s32 2, %v468
    %v470 = vrot.slane %v457, %v469
    %v471 = vlaneseq
    %v472 = vshrl.u32 %v471, 7
    %v473 = vsub.s32 3, %v472
    %v474 = vrot.slane %v457, %v473
    %v479 = vmul.f32 %v453, %v462
    %v480 = vmul.f32 %v454, %v466
    %v481 = vmul.f32 %v455, %v470
    %v482 = vmul.f32 %v456, %v474
    %v483 = vadd.f32 %v479, %v480
    %v484 = vadd.f32 %v483, %v481
    %v485 = vadd.f32 %v484, %v482
    %486 = vadd.xlane.f32.xlu0 %v485
    %v487 = vpop.xlane.xlu0 %486
    %v488 = vld [vmem:[#allocation2] sm:$0x1]
    %v490 = vlaneseq
    %v491 = vshrl.u32 %v490, 7
    %v492 = vsub.s32 0, %v491
    %v493 = vrot.slane %v488, %v492
    %v495 = vadd.f32 %v487, %v493
    %vm496 = vcmask 7168
    %497 = vst.msk [vmem:[%s5] sm:$0xff] %vm496, %v495
    // Predicated region
    $region30: #{toynet_forward.1} parent=1 // pred_check
      _
    $region31: #{toynet_forward.1} parent=1 // pred_check_branch
      %499 = sbr.rel (0) target = $region33
    $region32: #{toynet_forward.1} parent=1 // pred_region
      _
    $region33: #{toynet_forward.1} parent=1 // pred_fallthru
      _
    // Predicated region
    $region34: #{toynet_forward.1} parent=1 // pred_check
      _
    $region35: #{toynet_forward.1} parent=1 // pred_check_branch
      %501 = sbr.rel (0) target = $region37
    $region36: #{toynet_forward.1} parent=1 // pred_region
      _
    $region37: #{toynet_forward.1} parent=1 // pred_fallthru
      _
    %502 = vsyncpa [#allocation4], 1
    %503 = vsyncpa [#allocation6], 1

</llo_original>
